<compile_context>
chip_gen: v7x
topology: tpu7x:2x2x1
jax: 0.10.0
libtpu: 0.0.40
codegen_flags: <defaults>
</compile_context>

<pallas_src>
import functools

import jax
import jax.numpy as jnp
from jax.experimental import pallas as pl
from jax.experimental.pallas import tpu as pltpu

LN_EPS = 1e-5


def _round_up(x, m):
    return ((x + m - 1) // m) * m


def _single_buffered_spec(shape, index_map):
    """Constant block fetched once for the whole grid; single-buffered."""
    try:
        return pl.BlockSpec(shape, index_map, pipeline_mode=pl.Buffered(1))
    except TypeError:  # older BlockSpec signature without pipeline_mode
        return pl.BlockSpec(shape, index_map)


def saturn_kernel(x_ref, w1_ref, b1_ref, g1_ref, be1_ref,
                  w2_ref, b2_ref, g2_ref, be2_ref,
                  o_ref, acc_ref, *,
                  hidden_dim, embed_dim, k_tile, w1_resident):
    k = pl.program_id(1)

    @pl.when(k == 0)
    def _():
        # Initialise the accumulator with the broadcast bias (saves the
        # epilogue add).
        acc_ref[...] = jnp.broadcast_to(b1_ref[...], acc_ref.shape)

    if w1_resident:
        # The whole (padded) W1 lives in VMEM; slice out this K slab.
        base = pl.multiple_of(k * k_tile, k_tile)
        w1_blk = w1_ref[pl.ds(base, k_tile), :]
    else:
        w1_blk = w1_ref[...]

    # Partial x @ W1 for this K slab: bf16 MXU inputs, f32 accumulation.
    acc_ref[...] += jnp.dot(x_ref[...].astype(jnp.bfloat16), w1_blk,
                            preferred_element_type=jnp.float32)

    @pl.when(k == pl.num_programs(1) - 1)
    def _():
        # ---- block 1: LayerNorm(hidden) + ReLU (Dropout p=0 is identity) --
        h = acc_ref[...]                                    # bias already added
        inv_h = 1.0 / hidden_dim
        mu1 = jnp.sum(h, axis=-1, keepdims=True) * inv_h
        c1 = h - mu1
        var1 = jnp.sum(c1 * c1, axis=-1, keepdims=True) * inv_h
        h = c1 * jax.lax.rsqrt(var1 + LN_EPS)
        h = h * g1_ref[...] + be1_ref[...]
        h = jnp.maximum(h, 0.0)

        # ---- block 2: Linear + LayerNorm(embed) + ReLU ---------------------
        # Padded embed columns of W2/b2 are zero -> e is exactly zero there.
        e = jnp.dot(h.astype(jnp.bfloat16), w2_ref[...],
                    preferred_element_type=jnp.float32) + b2_ref[...]
        e_pad = e.shape[-1]
        inv_e = 1.0 / embed_dim
        mu2 = jnp.sum(e, axis=-1, keepdims=True) * inv_e    # padded cols add 0
        c2 = e - mu2
        if e_pad != embed_dim:
            # Mask the padded columns out of the variance sum; their final
            # value is forced to zero by the zero-padded gamma2/beta2 anyway.
            col = jax.lax.broadcasted_iota(jnp.int32, e.shape, 1)
            c2 = jnp.where(col < embed_dim, c2, 0.0)
        var2 = jnp.sum(c2 * c2, axis=-1, keepdims=True) * inv_e
        e = c2 * jax.lax.rsqrt(var2 + LN_EPS)
        e = e * g2_ref[...] + be2_ref[...]
        o_ref[...] = jnp.maximum(e, 0.0).astype(o_ref.dtype)


def prepare_params(params, *, k_tile=1024):
    """One-time weight padding + bf16 cast.  Call once at model init, NOT per
    forward (the per-call cast was a full extra HBM pass)."""
    w1, b1, g1, be1, w2, b2, g2, be2 = params
    d_in, hidden = w1.shape
    embed = w2.shape[1]

    if d_in <= k_tile:
        tk, d_pad = d_in, d_in
    else:
        assert k_tile % 128 == 0, "k_tile must be a multiple of 128 lanes"
        tk, d_pad = k_tile, _round_up(d_in, k_tile)
    e_pad = _round_up(max(embed, 128), 128)                 # lane-dense output

    w1p = jnp.pad(w1, ((0, d_pad - d_in), (0, 0))).astype(jnp.bfloat16)
    # Columns [embed, e_pad) MUST stay zero (see contract in the header).
    w2p = jnp.pad(w2, ((0, 0), (0, e_pad - embed))).astype(jnp.bfloat16)
    b2p = jnp.pad(b2, ((0, 0), (0, e_pad - embed)))
    g2p = jnp.pad(g2, ((0, 0), (0, e_pad - embed)))
    be2p = jnp.pad(be2, ((0, 0), (0, e_pad - embed)))

    weights = (w1p, b1, g1, be1, w2p, b2p, g2p, be2p)
    meta = dict(input_dim=d_in, d_pad=d_pad, k_tile=tk,
                hidden_dim=hidden, embed_dim=embed, e_pad=e_pad)
    return weights, meta


def saturn_forward(x, prepared, *, batch_tile=512,
                   w1_resident_bytes=16 * 1024 * 1024):
    """Forward pass of SATURNMetricModel (non-VAE path).

    `prepared` is the output of prepare_params().  x is (batch, input_dim) in
    f32 or bf16; it is padded here only when batch / input_dim are ragged
    w.r.t. the tiling.
    """
    weights, meta = prepared
    w1p, b1, g1, be1, w2p, b2p, g2p, be2p = weights
    B, D_in = x.shape
    assert D_in == meta["input_dim"]
    H, E, E_pad = meta["hidden_dim"], meta["embed_dim"], meta["e_pad"]
    D_pad, tk = meta["d_pad"], meta["k_tile"]

    # ---- batch tiling: big tiles, but keep >= 2 tiles for v7x's 2 TCs -------
    B_ceil = _round_up(B, 8)
    tm = min(_round_up(batch_tile, 8), B_ceil)
    if B_ceil >= 16 and B_ceil // tm < 2:
        tm = _round_up(-(-B_ceil // 2), 8)
    B_pad = _round_up(B, tm)

    # ---- pad x only when actually ragged (a zero-width pad is free) ---------
    if (B_pad, D_pad) != (B, D_in):
        x = jnp.pad(x, ((0, B_pad - B), (0, D_pad - D_in)))

    # ---- W1 residency decision ----------------------------------------------
    w1_bytes = D_pad * H * 2                                 # bf16
    w1_resident = w1_bytes <= w1_resident_bytes
    if w1_resident:
        # Fetched once for the whole grid; K slab sliced inside the kernel.
        w1_spec = _single_buffered_spec((D_pad, H), lambda i, k: (0, 0))
    else:
        w1_spec = pl.BlockSpec((tk, H), lambda i, k: (k, 0))

    grid = (B_pad // tm, D_pad // tk)

    # ---- VMEM budget derived from the actual working set (v7x: 64 MiB) ------
    working = (2 * tm * tk * x.dtype.itemsize                # x (double buf)
               + (w1_bytes if w1_resident else 2 * tk * H * 2)
               + 2 * H * E_pad * 2                           # W2
               + 8 * 2 * 8 * max(H, E_pad) * 4               # small vectors
               + tm * H * 4                                  # f32 accumulator
               + 2 * tm * E_pad * 4)                         # output (dbl buf)
    vmem_limit = int(min(max(2 * working + (4 << 20), 8 << 20), 64 << 20))

    def const_spec(cols):
        return pl.BlockSpec((1, cols), lambda i, k: (0, 0))

    kernel = functools.partial(saturn_kernel, hidden_dim=H, embed_dim=E,
                               k_tile=tk, w1_resident=w1_resident)

    out = pl.pallas_call(
        kernel,
        out_shape=jax.ShapeDtypeStruct((B_pad, E_pad), jnp.float32),
        grid_spec=pltpu.PrefetchScalarGridSpec(
            num_scalar_prefetch=0,
            grid=grid,
            in_specs=[
                pl.BlockSpec((tm, tk), lambda i, k: (i, k)),    # x tile
                w1_spec,                                        # W1
                const_spec(H),                                  # b1
                const_spec(H),                                  # gamma1
                const_spec(H),                                  # beta1
                pl.BlockSpec((H, E_pad), lambda i, k: (0, 0)),  # W2 (padded)
                const_spec(E_pad),                              # b2
                const_spec(E_pad),                              # gamma2
                const_spec(E_pad),                              # beta2
            ],
            out_specs=pl.BlockSpec((tm, E_pad), lambda i, k: (i, 0)),
            scratch_shapes=[pltpu.VMEM((tm, H), jnp.float32)],
        ),
        compiler_params=pltpu.CompilerParams(
            dimension_semantics=("parallel", "arbitrary"),
            vmem_limit_bytes=vmem_limit,
        ),
    )(x, w1p, b1, g1, be1, w2p, b2p, g2p, be2p)

    return out[:B, :E]


def init_params(key, input_dim, hidden_dim, embed_dim):
    k1, k2, k3, k4 = jax.random.split(key, 4)
    lim1 = 1.0 / jnp.sqrt(input_dim)
    lim2 = 1.0 / jnp.sqrt(hidden_dim)
    w1 = jax.random.uniform(k1, (input_dim, hidden_dim), jnp.float32, -lim1, lim1)
    b1 = jax.random.uniform(k2, (1, hidden_dim), jnp.float32, -lim1, lim1)
    g1 = jnp.ones((1, hidden_dim), jnp.float32)
    be1 = jnp.zeros((1, hidden_dim), jnp.float32)
    w2 = jax.random.uniform(k3, (hidden_dim, embed_dim), jnp.float32, -lim2, lim2)
    b2 = jax.random.uniform(k4, (1, embed_dim), jnp.float32, -lim2, lim2)
    g2 = jnp.ones((1, embed_dim), jnp.float32)
    be2 = jnp.zeros((1, embed_dim), jnp.float32)
    return (w1, b1, g1, be1, w2, b2, g2, be2)


def reference_forward(x, params):
    # Pure f32 reference matching torch semantics (biased variance, eps=1e-5).
    w1, b1, g1, be1, w2, b2, g2, be2 = params
    h = x @ w1 + b1
    mu = h.mean(-1, keepdims=True)
    var = ((h - mu) ** 2).mean(-1, keepdims=True)
    h = (h - mu) / jnp.sqrt(var + LN_EPS) * g1 + be1
    h = jnp.maximum(h, 0.0)
    e = h @ w2 + b2
    mu = e.mean(-1, keepdims=True)
    var = ((e - mu) ** 2).mean(-1, keepdims=True)
    e = (e - mu) / jnp.sqrt(var + LN_EPS) * g2 + be2
    return jnp.maximum(e, 0.0)


if __name__ == "__main__":
    # Small shapes consistent with the module defaults (hidden=128, embed=10),
    # scaled-down batch and gene count.  k_tile=128 -> 2 K slabs over
    # input_dim=256 (exercises the accumulator path); batch=12 -> padded to 16
    # and split into two batch tiles of 8 (ragged batch + multi-tile path).
    B, INPUT_DIM, HIDDEN_DIM, EMBED_DIM = 12, 256, 128, 10

    key = jax.random.PRNGKey(0)
    kx, kp = jax.random.split(key)
    x = jax.random.normal(kx, (B, INPUT_DIM), dtype=jnp.float32)
    params = init_params(kp, INPUT_DIM, HIDDEN_DIM, EMBED_DIM)
    ref = reference_forward(x, params)

    prepared = prepare_params(params, k_tile=128)   # one-time pad + bf16 cast

    # Path 1: VMEM-resident W1 (fetched once, K slab sliced with pl.ds).
    out_res = jax.block_until_ready(saturn_forward(x, prepared))
    # Path 2: streaming W1 (force by zeroing the residency budget).
    out_str = jax.block_until_ready(
        saturn_forward(x, prepared, w1_resident_bytes=0))

    for name, out in (("resident-W1", out_res), ("streaming-W1", out_str)):
        assert out.shape == (B, EMBED_DIM)
        err = float(jnp.max(jnp.abs(out - ref)))
        # bf16 MXU inputs -> compare against the pure-f32 reference with a
        # bf16-level tolerance (accumulation / LN / ReLU are all f32).
        assert jnp.allclose(out, ref, atol=3e-2, rtol=3e-2), (
            f"{name} mismatch vs reference: max abs err = {err}")
    print("KERNEL_OK")
</pallas_src>

<mosaic_0001>
module attributes {stable_mosaic.version = 11 : i64} {
  func.func @saturn_kernel(%arg0: i32, %arg1: i32, %arg2: memref<8x128xf32, #tpu.memory_space<vmem>>, %arg3: memref<256x128xbf16, #tpu.memory_space<vmem>>, %arg4: memref<1x128xf32, #tpu.memory_space<vmem>>, %arg5: memref<1x128xf32, #tpu.memory_space<vmem>>, %arg6: memref<1x128xf32, #tpu.memory_space<vmem>>, %arg7: memref<128x128xbf16, #tpu.memory_space<vmem>>, %arg8: memref<1x128xf32, #tpu.memory_space<vmem>>, %arg9: memref<1x128xf32, #tpu.memory_space<vmem>>, %arg10: memref<1x128xf32, #tpu.memory_space<vmem>>, %arg11: memref<8x128xf32, #tpu.memory_space<vmem>>, %arg12: memref<8x128xf32, #tpu.memory_space<vmem>>) attributes {dimension_semantics = [#tpu.dimension_semantics<parallel>, #tpu.dimension_semantics<arbitrary>], iteration_bounds = array<i64: 2, 2>, scalar_prefetch = 0 : i64, scratch_operands = 1 : i64, tpu.core_type = #tpu.core_type<tc>, window_params = [{transform_indices = @transform_0, window_bounds = array<i64: 8, 128>}, {pipeline_mode = #tpu.pipeline_mode<synchronous>, transform_indices = @transform_1, window_bounds = array<i64: 256, 128>}, {pipeline_mode = #tpu.pipeline_mode<synchronous>, transform_indices = @transform_2, window_bounds = array<i64: 1, 128>}, {pipeline_mode = #tpu.pipeline_mode<synchronous>, transform_indices = @transform_3, window_bounds = array<i64: 1, 128>}, {pipeline_mode = #tpu.pipeline_mode<synchronous>, transform_indices = @transform_4, window_bounds = array<i64: 1, 128>}, {pipeline_mode = #tpu.pipeline_mode<synchronous>, transform_indices = @transform_5, window_bounds = array<i64: 128, 128>}, {pipeline_mode = #tpu.pipeline_mode<synchronous>, transform_indices = @transform_6, window_bounds = array<i64: 1, 128>}, {pipeline_mode = #tpu.pipeline_mode<synchronous>, transform_indices = @transform_7, window_bounds = array<i64: 1, 128>}, {pipeline_mode = #tpu.pipeline_mode<synchronous>, transform_indices = @transform_8, window_bounds = array<i64: 1, 128>}, {transform_indices = @transform_9, window_bounds = array<i64: 8, 128>}]} {
    %c0_i32 = arith.constant 0 : i32
    %0 = arith.cmpi eq, %arg1, %c0_i32 : i32
    %1 = arith.extui %0 : i1 to i32
    %c0_i32_0 = arith.constant 0 : i32
    %2 = arith.cmpi ne, %1, %c0_i32_0 : i32
    scf.if %2 {
      %c0_8 = arith.constant 0 : index
      %c0_9 = arith.constant 0 : index
      %16 = vector.load %arg4[%c0_8, %c0_9] : memref<1x128xf32, #tpu.memory_space<vmem>>, vector<1x128xf32>
      %17 = vector.shape_cast %16 : vector<1x128xf32> to vector<1x128xf32>
      %18 = vector.broadcast %17 : vector<1x128xf32> to vector<8x128xf32>
      %c0_10 = arith.constant 0 : index
      %c0_11 = arith.constant 0 : index
      %19 = vector.load %arg12[%c0_10, %c0_11] : memref<8x128xf32, #tpu.memory_space<vmem>>, vector<8x128xf32>
      tpu.vector_store %arg12[%c0_10, %c0_11], %18 {strides = array<i32>} : memref<8x128xf32, #tpu.memory_space<vmem>>, vector<8x128xf32>,
    } else {
    }
    %c128_i32 = arith.constant 128 : i32
    %3 = arith.muli %arg1, %c128_i32 : i32
    %4 = tpu.assume_multiple %3, 128 : i32
    %5 = arith.index_cast %4 : i32 to index
    %c0 = arith.constant 0 : index
    %6 = vector.load %arg3[%5, %c0] : memref<256x128xbf16, #tpu.memory_space<vmem>>, vector<128x128xbf16>
    %c0_1 = arith.constant 0 : index
    %c0_2 = arith.constant 0 : index
    %7 = vector.load %arg12[%c0_1, %c0_2] : memref<8x128xf32, #tpu.memory_space<vmem>>, vector<8x128xf32>
    %c0_3 = arith.constant 0 : index
    %c0_4 = arith.constant 0 : index
    %8 = vector.load %arg2[%c0_3, %c0_4] : memref<8x128xf32, #tpu.memory_space<vmem>>, vector<8x128xf32>
    %9 = arith.truncf %8 : vector<8x128xf32> to vector<8x128xbf16>
    %cst = arith.constant dense<0.000000e+00> : vector<8x128xf32>
    %10 = tpu.matmul %9, %6, %cst {dimension_numbers = #tpu.dot_dimension_numbers<[1], [0], [0], [1], [0, 0, 1, 1], [], []>} : vector<8x128xbf16>, vector<128x128xbf16>, vector<8x128xf32> -> vector<8x128xf32>
    %11 = arith.addf %7, %10 : vector<8x128xf32>
    %c0_5 = arith.constant 0 : index
    %c0_6 = arith.constant 0 : index
    %12 = vector.load %arg12[%c0_5, %c0_6] : memref<8x128xf32, #tpu.memory_space<vmem>>, vector<8x128xf32>
    tpu.vector_store %arg12[%c0_5, %c0_6], %11 {strides = array<i32>} : memref<8x128xf32, #tpu.memory_space<vmem>>, vector<8x128xf32>,
    %c1_i32 = arith.constant 1 : i32
    %13 = arith.cmpi eq, %arg1, %c1_i32 : i32
    %14 = arith.extui %13 : i1 to i32
    %c0_i32_7 = arith.constant 0 : i32
    %15 = arith.cmpi ne, %14, %c0_i32_7 : i32
    scf.if %15 {
      %c0_8 = arith.constant 0 : index
      %c0_9 = arith.constant 0 : index
      %16 = vector.load %arg12[%c0_8, %c0_9] : memref<8x128xf32, #tpu.memory_space<vmem>>, vector<8x128xf32>
      %cst_10 = arith.constant dense<0.000000e+00> : vector<8xf32>
      %17 = vector.multi_reduction <add>, %16, %cst_10 [1] : vector<8x128xf32> to vector<8xf32>
      %18 = vector.shape_cast %17 : vector<8xf32> to vector<8x1xf32>
      %cst_11 = arith.constant 7.812500e-03 : f32
      %19 = vector.broadcast %cst_11 : f32 to vector<8x1xf32>
      %20 = arith.mulf %18, %19 : vector<8x1xf32>
      %21 = vector.broadcast %20 : vector<8x1xf32> to vector<8x128xf32>
      %22 = arith.subf %16, %21 : vector<8x128xf32>
      %23 = arith.mulf %22, %22 : vector<8x128xf32>
      %cst_12 = arith.constant dense<0.000000e+00> : vector<8xf32>
      %24 = vector.multi_reduction <add>, %23, %cst_12 [1] : vector<8x128xf32> to vector<8xf32>
      %25 = vector.shape_cast %24 : vector<8xf32> to vector<8x1xf32>
      %cst_13 = arith.constant 7.812500e-03 : f32
      %26 = vector.broadcast %cst_13 : f32 to vector<8x1xf32>
      %27 = arith.mulf %25, %26 : vector<8x1xf32>
      %cst_14 = arith.constant 9.99999974E-6 : f32
      %28 = vector.broadcast %cst_14 : f32 to vector<8x1xf32>
      %29 = arith.addf %27, %28 : vector<8x1xf32>
      %30 = math.rsqrt %29 : vector<8x1xf32>
      %31 = vector.broadcast %30 : vector<8x1xf32> to vector<8x128xf32>
      %32 = arith.mulf %22, %31 : vector<8x128xf32>
      %c0_15 = arith.constant 0 : index
      %c0_16 = arith.constant 0 : index
      %33 = vector.load %arg5[%c0_15, %c0_16] : memref<1x128xf32, #tpu.memory_space<vmem>>, vector<1x128xf32>
      %34 = vector.broadcast %33 : vector<1x128xf32> to vector<8x128xf32>
      %35 = arith.mulf %32, %34 : vector<8x128xf32>
      %c0_17 = arith.constant 0 : index
      %c0_18 = arith.constant 0 : index
      %36 = vector.load %arg6[%c0_17, %c0_18] : memref<1x128xf32, #tpu.memory_space<vmem>>, vector<1x128xf32>
      %37 = vector.broadcast %36 : vector<1x128xf32> to vector<8x128xf32>
      %38 = arith.addf %35, %37 : vector<8x128xf32>
      %cst_19 = arith.constant 0.000000e+00 : f32
      %39 = vector.broadcast %cst_19 : f32 to vector<8x128xf32>
      %40 = arith.maximumf %38, %39 : vector<8x128xf32>
      %41 = arith.truncf %40 : vector<8x128xf32> to vector<8x128xbf16>
      %c0_20 = arith.constant 0 : index
      %c0_21 = arith.constant 0 : index
      %42 = vector.load %arg7[%c0_20, %c0_21] : memref<128x128xbf16, #tpu.memory_space<vmem>>, vector<128x128xbf16>
      %cst_22 = arith.constant dense<0.000000e+00> : vector<8x128xf32>
      %43 = tpu.matmul %41, %42, %cst_22 {dimension_numbers = #tpu.dot_dimension_numbers<[1], [0], [0], [1], [0, 0, 1, 1], [], []>} : vector<8x128xbf16>, vector<128x128xbf16>, vector<8x128xf32> -> vector<8x128xf32>
      %c0_23 = arith.constant 0 : index
      %c0_24 = arith.constant 0 : index
      %44 = vector.load %arg8[%c0_23, %c0_24] : memref<1x128xf32, #tpu.memory_space<vmem>>, vector<1x128xf32>
      %45 = vector.broadcast %44 : vector<1x128xf32> to vector<8x128xf32>
      %46 = arith.addf %43, %45 : vector<8x128xf32>
      %cst_25 = arith.constant dense<0.000000e+00> : vector<8xf32>
      %47 = vector.multi_reduction <add>, %46, %cst_25 [1] : vector<8x128xf32> to vector<8xf32>
      %48 = vector.shape_cast %47 : vector<8xf32> to vector<8x1xf32>
      %cst_26 = arith.constant 1.000000e-01 : f32
      %49 = vector.broadcast %cst_26 : f32 to vector<8x1xf32>
      %50 = arith.mulf %48, %49 : vector<8x1xf32>
      %51 = vector.broadcast %50 : vector<8x1xf32> to vector<8x128xf32>
      %52 = arith.subf %46, %51 : vector<8x128xf32>
      %53 = tpu.iota {dimensions = array<i32: 1>} : vector<8x128xi32>
      %c10_i32 = arith.constant 10 : i32
      %54 = vector.broadcast %c10_i32 : i32 to vector<8x128xi32>
      %55 = arith.cmpi slt, %53, %54 : vector<8x128xi32>
      %cst_27 = arith.constant 0.000000e+00 : f32
      %56 = vector.broadcast %cst_27 : f32 to vector<8x128xf32>
      %57 = arith.select %55, %52, %56 : vector<8x128xi1>, vector<8x128xf32>
      %58 = arith.mulf %57, %57 : vector<8x128xf32>
      %cst_28 = arith.constant dense<0.000000e+00> : vector<8xf32>
      %59 = vector.multi_reduction <add>, %58, %cst_28 [1] : vector<8x128xf32> to vector<8xf32>
      %60 = vector.shape_cast %59 : vector<8xf32> to vector<8x1xf32>
      %cst_29 = arith.constant 1.000000e-01 : f32
      %61 = vector.broadcast %cst_29 : f32 to vector<8x1xf32>
      %62 = arith.mulf %60, %61 : vector<8x1xf32>
      %cst_30 = arith.constant 9.99999974E-6 : f32
      %63 = vector.broadcast %cst_30 : f32 to vector<8x1xf32>
      %64 = arith.addf %62, %63 : vector<8x1xf32>
      %65 = math.rsqrt %64 : vector<8x1xf32>
      %66 = vector.broadcast %65 : vector<8x1xf32> to vector<8x128xf32>
      %67 = arith.mulf %57, %66 : vector<8x128xf32>
      %c0_31 = arith.constant 0 : index
      %c0_32 = arith.constant 0 : index
      %68 = vector.load %arg9[%c0_31, %c0_32] : memref<1x128xf32, #tpu.memory_space<vmem>>, vector<1x128xf32>
      %69 = vector.broadcast %68 : vector<1x128xf32> to vector<8x128xf32>
      %70 = arith.mulf %67, %69 : vector<8x128xf32>
      %c0_33 = arith.constant 0 : index
      %c0_34 = arith.constant 0 : index
      %71 = vector.load %arg10[%c0_33, %c0_34] : memref<1x128xf32, #tpu.memory_space<vmem>>, vector<1x128xf32>
      %72 = vector.broadcast %71 : vector<1x128xf32> to vector<8x128xf32>
      %73 = arith.addf %70, %72 : vector<8x128xf32>
      %cst_35 = arith.constant 0.000000e+00 : f32
      %74 = vector.broadcast %cst_35 : f32 to vector<8x128xf32>
      %75 = arith.maximumf %73, %74 : vector<8x128xf32>
      %c0_36 = arith.constant 0 : index
      %c0_37 = arith.constant 0 : index
      %76 = vector.load %arg11[%c0_36, %c0_37] : memref<8x128xf32, #tpu.memory_space<vmem>>, vector<8x128xf32>
      tpu.vector_store %arg11[%c0_36, %c0_37], %75 {strides = array<i32>} : memref<8x128xf32, #tpu.memory_space<vmem>>, vector<8x128xf32>,
    } else {
    }
    return
  }
  func.func @transform_0(%arg0: i32, %arg1: i32) -> (i32, i32) {
    %c0_i32 = arith.constant 0 : i32
    return %arg0, %arg1 : i32, i32
  }
  func.func @transform_1(%arg0: i32, %arg1: i32) -> (i32, i32) {
    %c0_i32 = arith.constant 0 : i32
    %c0_i32_0 = arith.constant 0 : i32
    %c0_i32_1 = arith.constant 0 : i32
    return %c0_i32, %c0_i32_0 : i32, i32
  }
  func.func @transform_2(%arg0: i32, %arg1: i32) -> (i32, i32) {
    %c0_i32 = arith.constant 0 : i32
    %c0_i32_0 = arith.constant 0 : i32
    %c0_i32_1 = arith.constant 0 : i32
    return %c0_i32, %c0_i32_0 : i32, i32
  }
  func.func @transform_3(%arg0: i32, %arg1: i32) -> (i32, i32) {
    %c0_i32 = arith.constant 0 : i32
    %c0_i32_0 = arith.constant 0 : i32
    %c0_i32_1 = arith.constant 0 : i32
    return %c0_i32, %c0_i32_0 : i32, i32
  }
  func.func @transform_4(%arg0: i32, %arg1: i32) -> (i32, i32) {
    %c0_i32 = arith.constant 0 : i32
    %c0_i32_0 = arith.constant 0 : i32
    %c0_i32_1 = arith.constant 0 : i32
    return %c0_i32, %c0_i32_0 : i32, i32
  }
  func.func @transform_5(%arg0: i32, %arg1: i32) -> (i32, i32) {
    %c0_i32 = arith.constant 0 : i32
    %c0_i32_0 = arith.constant 0 : i32
    %c0_i32_1 = arith.constant 0 : i32
    return %c0_i32, %c0_i32_0 : i32, i32
  }
  func.func @transform_6(%arg0: i32, %arg1: i32) -> (i32, i32) {
    %c0_i32 = arith.constant 0 : i32
    %c0_i32_0 = arith.constant 0 : i32
    %c0_i32_1 = arith.constant 0 : i32
    return %c0_i32, %c0_i32_0 : i32, i32
  }
  func.func @transform_7(%arg0: i32, %arg1: i32) -> (i32, i32) {
    %c0_i32 = arith.constant 0 : i32
    %c0_i32_0 = arith.constant 0 : i32
    %c0_i32_1 = arith.constant 0 : i32
    return %c0_i32, %c0_i32_0 : i32, i32
  }
  func.func @transform_8(%arg0: i32, %arg1: i32) -> (i32, i32) {
    %c0_i32 = arith.constant 0 : i32
    %c0_i32_0 = arith.constant 0 : i32
    %c0_i32_1 = arith.constant 0 : i32
    return %c0_i32, %c0_i32_0 : i32, i32
  }
  func.func @transform_9(%arg0: i32, %arg1: i32) -> (i32, i32) {
    %c0_i32 = arith.constant 0 : i32
    %c0_i32_0 = arith.constant 0 : i32
    return %arg0, %c0_i32 : i32, i32
  }
}

</mosaic_0001>

<llo_original>
// kernel: tpu_custom_call.1
$region0: #{tpu_custom_call.1}
  #allocation0 [shape = 'u32[]', space=smem, size = 0x4, offset = 0x4, fixed_abs, tag = 'smem constant byte address 0x4 - core index']
  #allocation1 [shape = 'u32[144,128]{1,0:T(1,128)}', space=vmem, size = 0x12000, scoped, tag = 'internal scratch']
  #allocation2 [shape = 'f32[8,128]{1,0:T(8,128)}', space=vmem, size = 0x1000, scoped, tag = 'scratch operand']
  %s0 = inlined_call_operand.hbm [shape: f32[16,256], index: 0, kind: input, shape index: {}]
  %s1 = inlined_call_operand.hbm [shape: bf16[256,128], index: 1, kind: input, shape index: {}]
  %s2 = inlined_call_operand.vmem [shape: f32[1,128], index: 2, kind: input, shape index: {}]
  %s3 = inlined_call_operand.vmem [shape: f32[1,128], index: 3, kind: input, shape index: {}]
  %s4 = inlined_call_operand.vmem [shape: f32[1,128], index: 4, kind: input, shape index: {}]
  %s5 = inlined_call_operand.hbm [shape: bf16[128,128], index: 5, kind: input, shape index: {}]
  %s6 = inlined_call_operand.vmem [shape: f32[1,128], index: 6, kind: input, shape index: {}]
  %s7 = inlined_call_operand.vmem [shape: f32[1,128], index: 7, kind: input, shape index: {}]
  %s8 = inlined_call_operand.vmem [shape: f32[1,128], index: 8, kind: input, shape index: {}]
  %s9 = inlined_call_operand.hbm [shape: f32[16,128], index: 9, kind: output, shape index: {}]
  %s10 = sld [smem:[#allocation0]]
  $region89: #{tpu_custom_call.1} parent=0
    _
  %s12 = ssub.s32 1, %s10
  %s13 = scalar_select 0, %s12, %s10
  $region1: #{tpu_custom_call.1} parent=0
    #allocation3 [shape = 'u8[8192]{0}', space=vmem, size = 0x2000, scoped, tag = 'input window, operand 0']
    #allocation4 [shape = 's32[2]{0}', space=sflag, size = 0x8, scoped, tag = 'scoped memory for tpu_custom_call.1']
    #allocation5 [shape = 's32[2]{0}', space=sflag, size = 0x8, scoped, tag = 'scoped memory for tpu_custom_call.1']
    #allocation6 [shape = 'u8[65536]{0}', space=vmem, size = 0x10000, scoped, tag = 'input window, operand 1, single buffered']
    #allocation7 [shape = 's32[1]{0}', space=sflag, size = 0x4, scoped, tag = 'scoped memory for tpu_custom_call.1']
    #allocation8 [shape = 'u8[32768]{0}', space=vmem, size = 0x8000, scoped, tag = 'input window, operand 5, single buffered']
    #allocation9 [shape = 'u8[8192]{0}', space=vmem, size = 0x2000, scoped, tag = 'output window, operand 0']
    %14 = vsyncpa [#allocation4], 0
    %s15 = scalar_lea.sflag [#allocation4], 1
    %16 = vsyncpa %s15, 0
    %17 = vsyncpa [#allocation7], 0
    %18 = vsyncpa [#allocation5], 0
    %s19 = scalar_lea.sflag [#allocation5], 1
    %20 = vsyncpa %s19, 0
    loop: start=0, step=1, limit=6
    $region2: #{tpu_custom_call.1} parent=1 // loop_pre_header
      _
    $region3: #{tpu_custom_call.1} parent=1 // loop_header
      %s22 = sphi 0, %s26
      %p23 = scmp.ge.s32.totalorder %s22, 6
      %s29 = sphi 0, %s41
      %s30 = sphi 0, %s37
      %s31 = sphi 0, %s29
      %s32 = sphi 0, %s30
      %s33 = sphi 0, %s31
      %s34 = sphi 0, %s32
      %s46 = sphi 0, %s48
      %s49 = sphi 0, %s46
      %s50 = sphi 0, %s49
      %s66 = sphi 0, %s50
      %s70 = sphi 0, %s70
      %s72 = sphi 0, %s70
      %s73 = sphi 0, %s72
      %s87 = sphi 0, %s73
      %s91 = sphi 0, %s91
      %s93 = sphi 0, %s91
      %s94 = sphi 0, %s93
      %s108 = sphi 0, %s94
      %s112 = sphi 0, %s112
      %s114 = sphi 0, %s112
      %s115 = sphi 0, %s114
      %s129 = sphi 0, %s115
      %s133 = sphi 0, %s133
      %s135 = sphi 0, %s133
      %s136 = sphi 0, %s135
      %s150 = sphi 0, %s136
      %s154 = sphi 0, %s154
      %s156 = sphi 0, %s154
      %s157 = sphi 0, %s156
      %s171 = sphi 0, %s157
      %s175 = sphi 0, %s175
      %s177 = sphi 0, %s175
      %s178 = sphi 0, %s177
      %s192 = sphi 0, %s178
      %s196 = sphi 0, %s196
      %s198 = sphi 0, %s196
      %s199 = sphi 0, %s198
      %s213 = sphi 0, %s199
      %s217 = sphi 0, %s217
      %s219 = sphi 0, %s217
      %s220 = sphi 0, %s219
      %s234 = sphi 0, %s220
      %s240 = sphi 0, %s242
      %s243 = sphi 0, %s240
      %s244 = sphi 0, %s243
      %s260 = sphi 0, %s244
    $region4: #{tpu_custom_call.1} parent=1 // loop_header_branch
      %25 = sbr.rel (%p23) target = $region8
    $region5: #{tpu_custom_call.1} parent=1 // loop_body
      %s27 = ssub.s32 %s22, 1
      %s28 = ssub.s32 %s22, 2
      %s35 = sadd.s32 1, %s30
      %p36 = scmp.ge.s32.totalorder %s35, 2
      %s37 = scalar_select %p36, 0, %s35
      %s38 = sadd.s32 1, %s29
      %s39 = scalar_select %p36, %s38, %s29
      %p40 = scmp.ge.s32.totalorder %s39, 2
      %s41 = scalar_select %p40, 0, %s39
      %s42 = ssub.s32 %s29, %s41
      %s43 = ssub.s32 %s30, %s37
      %s44 = sor.u32 %s42, %s43
      %p45 = scmp.eq.s32.totalorder %s44, 0
      %s47 = sadd.s32 %s46, 1
      %s48 = scalar_select %p45, %s46, %s47
      %p51 = pneg %p45
      %p52 = scmp.eq.s32.totalorder %s22, 3
      %p53 = por %p51, %p52
      %p54 = scmp.ne.s32.totalorder %s46, %s49
      %p55 = scmp.eq.s32.totalorder %s22, 0
      %p56 = por %p54, %p55
      %p57 = scmp.ne.s32.totalorder %s46, %s49
      %p58 = scmp.eq.s32.totalorder %s27, 3
      %p59 = por %p57, %p58
      %p60 = scmp.ne.s32.totalorder %s49, %s50
      %p61 = scmp.eq.s32.totalorder %s27, 0
      %p62 = por %p60, %p61
      %p63 = scmp.ne.s32.totalorder %s49, %s50
      %p64 = scmp.eq.s32.totalorder %s28, 3
      %p65 = por %p63, %p64
      %p67 = scmp.ne.s32.totalorder %s50, %s66
      %p68 = scmp.eq.s32.totalorder %s28, 0
      %p69 = por %p67, %p68
      %s71 = sadd.s32 %s70, 1
      %p74 = scmp.eq.s32.totalorder %s22, 3
      %p75 = scmp.ne.s32.totalorder %s70, %s72
      %p76 = scmp.eq.s32.totalorder %s22, 0
      %p77 = por %p75, %p76
      %p78 = scmp.ne.s32.totalorder %s70, %s72
      %p79 = scmp.eq.s32.totalorder %s27, 3
      %p80 = por %p78, %p79
      %p81 = scmp.ne.s32.totalorder %s72, %s73
      %p82 = scmp.eq.s32.totalorder %s27, 0
      %p83 = por %p81, %p82
      %p84 = scmp.ne.s32.totalorder %s72, %s73
      %p85 = scmp.eq.s32.totalorder %s28, 3
      %p86 = por %p84, %p85
      %p88 = scmp.ne.s32.totalorder %s73, %s87
      %p89 = scmp.eq.s32.totalorder %s28, 0
      %p90 = por %p88, %p89
      %s92 = sadd.s32 %s91, 1
      %p95 = scmp.eq.s32.totalorder %s22, 3
      %p96 = scmp.ne.s32.totalorder %s91, %s93
      %p97 = scmp.eq.s32.totalorder %s22, 0
      %p98 = por %p96, %p97
      %p99 = scmp.ne.s32.totalorder %s91, %s93
      %p100 = scmp.eq.s32.totalorder %s27, 3
      %p101 = por %p99, %p100
      %p102 = scmp.ne.s32.totalorder %s93, %s94
      %p103 = scmp.eq.s32.totalorder %s27, 0
      %p104 = por %p102, %p103
      %p105 = scmp.ne.s32.totalorder %s93, %s94
      %p106 = scmp.eq.s32.totalorder %s28, 3
      %p107 = por %p105, %p106
      %p109 = scmp.ne.s32.totalorder %s94, %s108
      %p110 = scmp.eq.s32.totalorder %s28, 0
      %p111 = por %p109, %p110
      %s113 = sadd.s32 %s112, 1
      %p116 = scmp.eq.s32.totalorder %s22, 3
      %p117 = scmp.ne.s32.totalorder %s112, %s114
      %p118 = scmp.eq.s32.totalorder %s22, 0
      %p119 = por %p117, %p118
      %p120 = scmp.ne.s32.totalorder %s112, %s114
      %p121 = scmp.eq.s32.totalorder %s27, 3
      %p122 = por %p120, %p121
      %p123 = scmp.ne.s32.totalorder %s114, %s115
      %p124 = scmp.eq.s32.totalorder %s27, 0
      %p125 = por %p123, %p124
      %p126 = scmp.ne.s32.totalorder %s114, %s115
      %p127 = scmp.eq.s32.totalorder %s28, 3
      %p128 = por %p126, %p127
      %p130 = scmp.ne.s32.totalorder %s115, %s129
      %p131 = scmp.eq.s32.totalorder %s28, 0
      %p132 = por %p130, %p131
      %s134 = sadd.s32 %s133, 1
      %p137 = scmp.eq.s32.totalorder %s22, 3
      %p138 = scmp.ne.s32.totalorder %s133, %s135
      %p139 = scmp.eq.s32.totalorder %s22, 0
      %p140 = por %p138, %p139
      %p141 = scmp.ne.s32.totalorder %s133, %s135
      %p142 = scmp.eq.s32.totalorder %s27, 3
      %p143 = por %p141, %p142
      %p144 = scmp.ne.s32.totalorder %s135, %s136
      %p145 = scmp.eq.s32.totalorder %s27, 0
      %p146 = por %p144, %p145
      %p147 = scmp.ne.s32.totalorder %s135, %s136
      %p148 = scmp.eq.s32.totalorder %s28, 3
      %p149 = por %p147, %p148
      %p151 = scmp.ne.s32.totalorder %s136, %s150
      %p152 = scmp.eq.s32.totalorder %s28, 0
      %p153 = por %p151, %p152
      %s155 = sadd.s32 %s154, 1
      %p158 = scmp.eq.s32.totalorder %s22, 3
      %p159 = scmp.ne.s32.totalorder %s154, %s156
      %p160 = scmp.eq.s32.totalorder %s22, 0
      %p161 = por %p159, %p160
      %p162 = scmp.ne.s32.totalorder %s154, %s156
      %p163 = scmp.eq.s32.totalorder %s27, 3
      %p164 = por %p162, %p163
      %p165 = scmp.ne.s32.totalorder %s156, %s157
      %p166 = scmp.eq.s32.totalorder %s27, 0
      %p167 = por %p165, %p166
      %p168 = scmp.ne.s32.totalorder %s156, %s157
      %p169 = scmp.eq.s32.totalorder %s28, 3
      %p170 = por %p168, %p169
      %p172 = scmp.ne.s32.totalorder %s157, %s171
      %p173 = scmp.eq.s32.totalorder %s28, 0
      %p174 = por %p172, %p173
      %s176 = sadd.s32 %s175, 1
      %p179 = scmp.eq.s32.totalorder %s22, 3
      %p180 = scmp.ne.s32.totalorder %s175, %s177
      %p181 = scmp.eq.s32.totalorder %s22, 0
      %p182 = por %p180, %p181
      %p183 = scmp.ne.s32.totalorder %s175, %s177
      %p184 = scmp.eq.s32.totalorder %s27, 3
      %p185 = por %p183, %p184
      %p186 = scmp.ne.s32.totalorder %s177, %s178
      %p187 = scmp.eq.s32.totalorder %s27, 0
      %p188 = por %p186, %p187
      %p189 = scmp.ne.s32.totalorder %s177, %s178
      %p190 = scmp.eq.s32.totalorder %s28, 3
      %p191 = por %p189, %p190
      %p193 = scmp.ne.s32.totalorder %s178, %s192
      %p194 = scmp.eq.s32.totalorder %s28, 0
      %p195 = por %p193, %p194
      %s197 = sadd.s32 %s196, 1
      %p200 = scmp.eq.s32.totalorder %s22, 3
      %p201 = scmp.ne.s32.totalorder %s196, %s198
      %p202 = scmp.eq.s32.totalorder %s22, 0
      %p203 = por %p201, %p202
      %p204 = scmp.ne.s32.totalorder %s196, %s198
      %p205 = scmp.eq.s32.totalorder %s27, 3
      %p206 = por %p204, %p205
      %p207 = scmp.ne.s32.totalorder %s198, %s199
      %p208 = scmp.eq.s32.totalorder %s27, 0
      %p209 = por %p207, %p208
      %p210 = scmp.ne.s32.totalorder %s198, %s199
      %p211 = scmp.eq.s32.totalorder %s28, 3
      %p212 = por %p210, %p211
      %p214 = scmp.ne.s32.totalorder %s199, %s213
      %p215 = scmp.eq.s32.totalorder %s28, 0
      %p216 = por %p214, %p215
      %s218 = sadd.s32 %s217, 1
      %p221 = scmp.eq.s32.totalorder %s22, 3
      %p222 = scmp.ne.s32.totalorder %s217, %s219
      %p223 = scmp.eq.s32.totalorder %s22, 0
      %p224 = por %p222, %p223
      %p225 = scmp.ne.s32.totalorder %s217, %s219
      %p226 = scmp.eq.s32.totalorder %s27, 3
      %p227 = por %p225, %p226
      %p228 = scmp.ne.s32.totalorder %s219, %s220
      %p229 = scmp.eq.s32.totalorder %s27, 0
      %p230 = por %p228, %p229
      %p231 = scmp.ne.s32.totalorder %s219, %s220
      %p232 = scmp.eq.s32.totalorder %s28, 3
      %p233 = por %p231, %p232
      %p235 = scmp.ne.s32.totalorder %s220, %s234
      %p236 = scmp.eq.s32.totalorder %s28, 0
      %p237 = por %p235, %p236
      %s238 = ssub.s32 %s29, %s41
      %p239 = scmp.eq.s32.totalorder %s238, 0
      %s241 = sadd.s32 %s240, 1
      %s242 = scalar_select %p239, %s240, %s241
      %p245 = pneg %p239
      %p246 = scmp.eq.s32.totalorder %s22, 3
      %p247 = por %p245, %p246
      %p248 = scmp.ne.s32.totalorder %s240, %s243
      %p249 = scmp.eq.s32.totalorder %s22, 0
      %p250 = por %p248, %p249
      %p251 = scmp.ne.s32.totalorder %s240, %s243
      %p252 = scmp.eq.s32.totalorder %s27, 3
      %p253 = por %p251, %p252
      %p254 = scmp.ne.s32.totalorder %s243, %s244
      %p255 = scmp.eq.s32.totalorder %s27, 0
      %p256 = por %p254, %p255
      %p257 = scmp.ne.s32.totalorder %s243, %s244
      %p258 = scmp.eq.s32.totalorder %s28, 3
      %p259 = por %p257, %p258
      %p261 = scmp.ne.s32.totalorder %s244, %s260
      %p262 = scmp.eq.s32.totalorder %s28, 0
      %p263 = por %p261, %p262
      %p264 = scmp.le.s32.totalorder 1, %s22
      %p265 = scmp.lt.s32.totalorder %s22, 5
      %p266 = pnand %p264, %p265
      %p267 = pneg %p266
      // Predicated region
      $region9: #{tpu_custom_call.1} parent=5 // pred_check
        _
      $region10: #{tpu_custom_call.1} parent=5 // pred_check_branch
        %269 = sbr.rel (%p266) target = $region12
      $region11: #{tpu_custom_call.1} parent=5 // pred_region
        %s270 = ssub.s32 %s22, 1
        // Predicated region
        $region13: #{tpu_custom_call.1} parent=11 // pred_check
          %p271 = pneg %p83
        $region14: #{tpu_custom_call.1} parent=11 // pred_check_branch
          %273 = sbr.rel (%p271) target = $region16
        $region15: #{tpu_custom_call.1} parent=11 // pred_region
          %s275 = ssub.s32 2048, 2048
          %276 = vsyncadd [#allocation7], %s275
          %s277 = sshll.u32 [#allocation6], 4
          %s278 = int_to_ptr.vmem [resolvable:$true] %s277
          %283 = dma.hbm_to_vmem [thread:$0]  %s1, 2048, %s278, [#allocation7], 64, 64, 4
        $region16: #{tpu_custom_call.1} parent=11 // pred_fallthru
          _
        // Predicated region
        $region17: #{tpu_custom_call.1} parent=11 // pred_check
          %p284 = pneg %p104
        $region18: #{tpu_custom_call.1} parent=11 // pred_check_branch
          %286 = sbr.rel (%p284) target = $region20
        $region19: #{tpu_custom_call.1} parent=11 // pred_region
          _
        $region20: #{tpu_custom_call.1} parent=11 // pred_fallthru
          _
        // Predicated region
        $region21: #{tpu_custom_call.1} parent=11 // pred_check
          %p287 = pneg %p125
        $region22: #{tpu_custom_call.1} parent=11 // pred_check_branch
          %289 = sbr.rel (%p287) target = $region24
        $region23: #{tpu_custom_call.1} parent=11 // pred_region
          _
        $region24: #{tpu_custom_call.1} parent=11 // pred_fallthru
          _
        // Predicated region
        $region25: #{tpu_custom_call.1} parent=11 // pred_check
          %p290 = pneg %p146
        $region26: #{tpu_custom_call.1} parent=11 // pred_check_branch
          %292 = sbr.rel (%p290) target = $region28
        $region27: #{tpu_custom_call.1} parent=11 // pred_region
          _
        $region28: #{tpu_custom_call.1} parent=11 // pred_fallthru
          _
        // Predicated region
        $region29: #{tpu_custom_call.1} parent=11 // pred_check
          %p293 = pneg %p167
        $region30: #{tpu_custom_call.1} parent=11 // pred_check_branch
          %295 = sbr.rel (%p293) target = $region32
        $region31: #{tpu_custom_call.1} parent=11 // pred_region
          %s297 = ssub.s32 1024, 1024
          %298 = vsyncadd [#allocation7], %s297
          %s299 = sshll.u32 [#allocation8], 4
          %s300 = int_to_ptr.vmem [resolvable:$true] %s299
          %305 = dma.hbm_to_vmem [thread:$0]  %s5, 1024, %s300, [#allocation7], 64, 64, 4
        $region32: #{tpu_custom_call.1} parent=11 // pred_fallthru
          _
        // Predicated region
        $region33: #{tpu_custom_call.1} parent=11 // pred_check
          %p306 = pneg %p188
        $region34: #{tpu_custom_call.1} parent=11 // pred_check_branch
          %308 = sbr.rel (%p306) target = $region36
        $region35: #{tpu_custom_call.1} parent=11 // pred_region
          _
        $region36: #{tpu_custom_call.1} parent=11 // pred_fallthru
          _
        // Predicated region
        $region37: #{tpu_custom_call.1} parent=11 // pred_check
          %p309 = pneg %p209
        $region38: #{tpu_custom_call.1} parent=11 // pred_check_branch
          %311 = sbr.rel (%p309) target = $region40
        $region39: #{tpu_custom_call.1} parent=11 // pred_region
          _
        $region40: #{tpu_custom_call.1} parent=11 // pred_fallthru
          _
        // Predicated region
        $region41: #{tpu_custom_call.1} parent=11 // pred_check
          %p312 = pneg %p230
        $region42: #{tpu_custom_call.1} parent=11 // pred_check_branch
          %314 = sbr.rel (%p312) target = $region44
        $region43: #{tpu_custom_call.1} parent=11 // pred_region
          _
        $region44: #{tpu_custom_call.1} parent=11 // pred_fallthru
          _
      $region12: #{tpu_custom_call.1} parent=5 // pred_fallthru
        _
      %p315 = scmp.lt.s32.totalorder %s22, 4
      // Predicated region
      $region45: #{tpu_custom_call.1} parent=5 // pred_check
        %p316 = pneg %p315
      $region46: #{tpu_custom_call.1} parent=5 // pred_check_branch
        %318 = sbr.rel (%p316) target = $region48
      $region47: #{tpu_custom_call.1} parent=5 // pred_region
        // Predicated region
        $region49: #{tpu_custom_call.1} parent=47 // pred_check
          %p319 = pneg %p56
        $region50: #{tpu_custom_call.1} parent=47 // pred_check_branch
          %321 = sbr.rel (%p319) target = $region52
        $region51: #{tpu_custom_call.1} parent=47 // pred_region
          %s322 = sand.u32 %s46, 1
          %s323 = scalar_lea.sflag [#allocation4], %s322
          %s324 = sand.u32 %s46, 1
          %s325 = smul.addr %s324, 8
          %s326 = scalar_lea.vmem [#allocation3], %s325
          %s328 = ssub.s32 128, 128
          %329 = vsyncadd %s323, %s328
          %s330 = smul.addr %s29, 2
          %s331 = sadd.s32 %s30, %s330
          %s332 = smul.addr %s331, 128
          %s333 = scalar_lea.hbm %s0, %s332
          %s335 = sshll.u32 %s326, 4
          %s336 = int_to_ptr.vmem [resolvable:$true] %s335
          %338 = dma.hbm_to_vmem [thread:$0]  %s333, 128, %s336, %s323
        $region52: #{tpu_custom_call.1} parent=47 // pred_fallthru
          _
      $region48: #{tpu_custom_call.1} parent=5 // pred_fallthru
        _
      %p339 = scmp.le.s32.totalorder 1, %s22
      %p340 = scmp.lt.s32.totalorder %s22, 5
      %p341 = pnand %p339, %p340
      %p342 = pneg %p341
      // Predicated region
      $region53: #{tpu_custom_call.1} parent=5 // pred_check
        _
      $region54: #{tpu_custom_call.1} parent=5 // pred_check_branch
        %344 = sbr.rel (%p341) target = $region56
      $region55: #{tpu_custom_call.1} parent=5 // pred_region
        %s345 = ssub.s32 %s22, 1
        %s346 = sand.u32 %s49, 1
        %s347 = scalar_lea.sflag [#allocation4], %s346
        %s348 = sand.u32 %s49, 1
        %s349 = smul.addr %s348, 8
        %s350 = scalar_lea.vmem [#allocation3], %s349
        // Predicated region
        $region57: #{tpu_custom_call.1} parent=55 // pred_check
          %p351 = pneg %p62
        $region58: #{tpu_custom_call.1} parent=55 // pred_check_branch
          %353 = sbr.rel (%p351) target = $region60
        $region59: #{tpu_custom_call.1} parent=55 // pred_region
          %354 = dma.done %s347, 128
        $region60: #{tpu_custom_call.1} parent=55 // pred_fallthru
          _
        // Predicated region
        $region61: #{tpu_custom_call.1} parent=55 // pred_check
          %p355 = pneg %p83
        $region62: #{tpu_custom_call.1} parent=55 // pred_check_branch
          %357 = sbr.rel (%p355) target = $region64
        $region63: #{tpu_custom_call.1} parent=55 // pred_region
          %358 = dma.done [#allocation7], 2048
        $region64: #{tpu_custom_call.1} parent=55 // pred_fallthru
          _
        // Predicated region
        $region65: #{tpu_custom_call.1} parent=55 // pred_check
          %p359 = pneg %p167
        $region66: #{tpu_custom_call.1} parent=55 // pred_check_branch
          %361 = sbr.rel (%p359) target = $region68
        $region67: #{tpu_custom_call.1} parent=55 // pred_region
          %362 = dma.done [#allocation7], 1024
        $region68: #{tpu_custom_call.1} parent=55 // pred_fallthru
          _
        %s363 = sand.u32 %s49, 1
        %s364 = scalar_lea.sflag [#allocation4], %s363
        %s365 = sand.u32 %s49, 1
        %s366 = smul.addr %s365, 8
        %s367 = scalar_lea.vmem [#allocation3], %s366
        %p368 = pneg %p62
        %p369 = pneg %p59
        %p370 = pneg %p83
        %p371 = pneg %p80
        %p372 = pneg %p104
        %p373 = pneg %p101
        %p374 = pneg %p125
        %p375 = pneg %p122
        %p376 = pneg %p146
        %p377 = pneg %p143
        %p378 = pneg %p167
        %p379 = pneg %p164
        %p380 = pneg %p188
        %p381 = pneg %p185
        %p382 = pneg %p209
        %p383 = pneg %p206
        %p384 = pneg %p230
        %p385 = pneg %p227
        %p386 = pneg %p256
        %p387 = pneg %p253
        %s388 = sand.u32 %s243, 1
        %s389 = scalar_lea.sflag [#allocation5], %s388
        %s390 = sand.u32 %s243, 1
        %s391 = smul.addr %s390, 8
        %s392 = scalar_lea.vmem [#allocation9], %s391
        %p394 = scmp.eq.s32.totalorder %s32, 0
        // Predicated region
        $region69: #{tpu_custom_call.1} parent=55 // pred_check
          %p395 = pneg %p394
        $region70: #{tpu_custom_call.1} parent=55 // pred_check_branch
          %397 = sbr.rel (%p395) target = $region72
        $region71: #{tpu_custom_call.1} parent=55 // pred_region
          %v398 = vld [vmem:[%s2] sm:$0x1]
          %v400 = vlaneseq
          %v401 = vshrl.u32 %v400, 7
          %v402 = vsub.s32 0, %v401
          %v403 = vrot.slane %v398, %v402
          %405 = vst [vmem:[#allocation2] sm:$0xff] %v403
        $region72: #{tpu_custom_call.1} parent=55 // pred_fallthru
          _
        %s406 = smul.u32 %s32, 128
        %s407 = sshra.s32 %s406, 3
        %s408 = sand.u32 %s406, 7
        %s409 = smul.addr %s407, 4
        %s410 = scalar_lea.vmem [#allocation6], %s409
        %v411 = vld [vmem:[%s410] sm:$0xf]
        %v412 = vld [vmem:[%s410 + $0x4] sm:$0xf]
        %v413 = vld [vmem:[%s410 + $0x8] sm:$0xf]
        %v414 = vld [vmem:[%s410 + $0xc] sm:$0xf]
        %v415 = vld [vmem:[%s410 + $0x10] sm:$0xf]
        %v416 = vld [vmem:[%s410 + $0x14] sm:$0xf]
        %v417 = vld [vmem:[%s410 + $0x18] sm:$0xf]
        %v418 = vld [vmem:[%s410 + $0x1c] sm:$0xf]
        %v419 = vld [vmem:[%s410 + $0x20] sm:$0xf]
        %v420 = vld [vmem:[%s410 + $0x24] sm:$0xf]
        %v421 = vld [vmem:[%s410 + $0x28] sm:$0xf]
        %v422 = vld [vmem:[%s410 + $0x2c] sm:$0xf]
        %v423 = vld [vmem:[%s410 + $0x30] sm:$0xf]
        %v424 = vld [vmem:[%s410 + $0x34] sm:$0xf]
        %v425 = vld [vmem:[%s410 + $0x38] sm:$0xf]
        %v426 = vld [vmem:[%s410 + $0x3c] sm:$0xf]
        %v427 = vld [vmem:[#allocation2] sm:$0xff]
        %v428 = vld [vmem:[%s350] sm:$0xff]
        %v429 = vpack.c.bf16 %v428, %v428
        %v446 = vunpack.c.l.b16 %v411
        %v447 = vunpack.c.l.b16 %v412
        %v448 = vunpack.c.l.b16 %v413
        %v449 = vunpack.c.l.b16 %v414
        %v450 = vunpack.c.l.b16 %v415
        %v451 = vunpack.c.l.b16 %v416
        %v452 = vunpack.c.l.b16 %v417
        %v453 = vunpack.c.l.b16 %v418
        %v454 = vunpack.c.l.b16 %v419
        %v455 = vunpack.c.l.b16 %v420
        %v456 = vunpack.c.l.b16 %v421
        %v457 = vunpack.c.l.b16 %v422
        %v458 = vunpack.c.l.b16 %v423
        %v459 = vunpack.c.l.b16 %v424
        %v460 = vunpack.c.l.b16 %v425
        %v461 = vunpack.c.l.b16 %v426
        %v462 = vpack.c.b16 %v447, %v446
        %v463 = vpack.c.b16 %v449, %v448
        %v464 = vpack.c.b16 %v451, %v450
        %v465 = vpack.c.b16 %v453, %v452
        %v466 = vpack.c.b16 %v455, %v454
        %v467 = vpack.c.b16 %v457, %v456
        %v468 = vpack.c.b16 %v459, %v458
        %v469 = vpack.c.b16 %v461, %v460
        %478 = vmatprep.subr.bf16.mxu0 0
        %479 = vmatpush1.bf16.msra.mxu0 %v462
        %480 = vmatprep.subr.bf16.mxu0 0
        %481 = vmatpush1.bf16.msra.mxu0 %v463
        %482 = vmatprep.subr.bf16.mxu0 0
        %483 = vmatpush1.bf16.msra.mxu0 %v464
        %484 = vmatprep.subr.bf16.mxu0 0
        %485 = vmatpush1.bf16.msra.mxu0 %v465
        %486 = vmatprep.subr.bf16.mxu0 0
        %487 = vmatpush1.bf16.msra.mxu0 %v466
        %488 = vmatprep.subr.bf16.mxu0 0
        %489 = vmatpush1.bf16.msra.mxu0 %v467
        %490 = vmatprep.subr.bf16.mxu0 0
        %491 = vmatpush1.bf16.msra.mxu0 %v468
        %492 = vmatprep.subr.bf16.mxu0 0
        %493 = vmatpush1.bf16.msra.mxu0 %v469
        %494 = vmatprep.subr.bf16.mxu0 0
        %495 = vmatpush1.bf16.msra.mxu0 0
        %496 = vmatprep.subr.bf16.mxu0 0
        %497 = vmatpush1.bf16.msra.mxu0 0
        %498 = vmatprep.subr.bf16.mxu0 0
        %499 = vmatpush1.bf16.msra.mxu0 0
        %500 = vmatprep.subr.bf16.mxu0 0
        %501 = vmatpush1.bf16.msra.mxu0 0
        %502 = vmatprep.subr.bf16.mxu0 0
        %503 = vmatpush1.bf16.msra.mxu0 0
        %504 = vmatprep.subr.bf16.mxu0 0
        %505 = vmatpush1.bf16.msra.mxu0 0
        %506 = vmatprep.subr.bf16.mxu0 0
        %507 = vmatpush1.bf16.msra.mxu0 0
        %508 = vmatprep.subr.bf16.mxu0 0
        %509 = vmatpush1.bf16.msra.mxu0 0
        %510 = vmatprep.mubr.bf16.mxu0 0
        %511 = vmatmul.mubr.bf16.gmra.mrb[0].mxu0 %v429
        %v512 = vpop.f32.mrb[0].mxu0
        %v513 = vadd.f32 0.0, %v512
        %v514 = vpop.f32.mrb[0].mxu0
        %v515 = vpop.f32.mrb[0].mxu0
        %v516 = vpop.f32.mrb[0].mxu0
        %517 = vdwg.mxu0
        %v518 = vadd.f32 %v427, %v513
        %519 = vst [vmem:[#allocation2] sm:$0xff] %v518
        %p520 = scmp.eq.s32.totalorder %s32, 1
        // Predicated region
        $region73: #{tpu_custom_call.1} parent=55 // pred_check
          %p521 = pneg %p520
        $region74: #{tpu_custom_call.1} parent=55 // pred_check_branch
          %523 = sbr.rel (%p521) target = $region76
        $region75: #{tpu_custom_call.1} parent=55 // pred_region
          %v524 = vld [vmem:[#allocation2] sm:$0xff]
          %525 = vadd.xlane.f32.xlu0 %v524
          %v526 = vpop.xlane.xlu0 %525
          %v527 = vmul.f32 %v526, 0.0078125
          %v528 = vsub.f32 %v524, %v527
          %v529 = vmul.f32 %v528, %v528
          %530 = vadd.xlane.f32.xlu0 %v529
          %v531 = vpop.xlane.xlu0 %530
          %v532 = vmul.f32 %v531, 0.0078125
          %v533 = vadd.f32 %v532, 1e-05
          %v534 = vrsqrt.pop %v533
          %v535 = vmul.f32 %v528, %v534
          %v536 = vld [vmem:[%s3] sm:$0x1]
          %v538 = vlaneseq
          %v539 = vshrl.u32 %v538, 7
          %v540 = vsub.s32 0, %v539
          %v541 = vrot.slane %v536, %v540
          %v543 = vmul.f32 %v535, %v541
          %v544 = vld [vmem:[%s4] sm:$0x1]
          %v546 = vlaneseq
          %v547 = vshrl.u32 %v546, 7
          %v548 = vsub.s32 0, %v547
          %v549 = vrot.slane %v544, %v548
          %v551 = vadd.f32 %v543, %v549
          %v552 = vmax.f32 %v551, 0.0
          %v553 = vpack.c.bf16 %v552, %v552
          %v554 = vld [vmem:[#allocation8] sm:$0xf]
          %v555 = vld [vmem:[#allocation8 + $0x4] sm:$0xf]
          %v556 = vld [vmem:[#allocation8 + $0x8] sm:$0xf]
          %v557 = vld [vmem:[#allocation8 + $0xc] sm:$0xf]
          %v558 = vld [vmem:[#allocation8 + $0x10] sm:$0xf]
          %v559 = vld [vmem:[#allocation8 + $0x14] sm:$0xf]
          %v560 = vld [vmem:[#allocation8 + $0x18] sm:$0xf]
          %v561 = vld [vmem:[#allocation8 + $0x1c] sm:$0xf]
          %v562 = vld [vmem:[#allocation8 + $0x20] sm:$0xf]
          %v563 = vld [vmem:[#allocation8 + $0x24] sm:$0xf]
          %v564 = vld [vmem:[#allocation8 + $0x28] sm:$0xf]
          %v565 = vld [vmem:[#allocation8 + $0x2c] sm:$0xf]
          %v566 = vld [vmem:[#allocation8 + $0x30] sm:$0xf]
          %v567 = vld [vmem:[#allocation8 + $0x34] sm:$0xf]
          %v568 = vld [vmem:[#allocation8 + $0x38] sm:$0xf]
          %v569 = vld [vmem:[#allocation8 + $0x3c] sm:$0xf]
          %v570 = vld [vmem:[%s6] sm:$0x1]
          %v572 = vlaneseq
          %v573 = vshrl.u32 %v572, 7
          %v574 = vsub.s32 0, %v573
          %v575 = vrot.slane %v570, %v574
          %v593 = vunpack.c.l.b16 %v554
          %v594 = vunpack.c.l.b16 %v555
          %v595 = vunpack.c.l.b16 %v556
          %v596 = vunpack.c.l.b16 %v557
          %v597 = vunpack.c.l.b16 %v558
          %v598 = vunpack.c.l.b16 %v559
          %v599 = vunpack.c.l.b16 %v560
          %v600 = vunpack.c.l.b16 %v561
          %v601 = vunpack.c.l.b16 %v562
          %v602 = vunpack.c.l.b16 %v563
          %v603 = vunpack.c.l.b16 %v564
          %v604 = vunpack.c.l.b16 %v565
          %v605 = vunpack.c.l.b16 %v566
          %v606 = vunpack.c.l.b16 %v567
          %v607 = vunpack.c.l.b16 %v568
          %v608 = vunpack.c.l.b16 %v569
          %v609 = vpack.c.b16 %v594, %v593
          %v610 = vpack.c.b16 %v596, %v595
          %v611 = vpack.c.b16 %v598, %v597
          %v612 = vpack.c.b16 %v600, %v599
          %v613 = vpack.c.b16 %v602, %v601
          %v614 = vpack.c.b16 %v604, %v603
          %v615 = vpack.c.b16 %v606, %v605
          %v616 = vpack.c.b16 %v608, %v607
          %625 = vmatprep.subr.bf16.mxu0 0
          %626 = vmatpush1.bf16.msra.mxu0 %v609
          %627 = vmatprep.subr.bf16.mxu0 0
          %628 = vmatpush1.bf16.msra.mxu0 %v610
          %629 = vmatprep.subr.bf16.mxu0 0
          %630 = vmatpush1.bf16.msra.mxu0 %v611
          %631 = vmatprep.subr.bf16.mxu0 0
          %632 = vmatpush1.bf16.msra.mxu0 %v612
          %633 = vmatprep.subr.bf16.mxu0 0
          %634 = vmatpush1.bf16.msra.mxu0 %v613
          %635 = vmatprep.subr.bf16.mxu0 0
          %636 = vmatpush1.bf16.msra.mxu0 %v614
          %637 = vmatprep.subr.bf16.mxu0 0
          %638 = vmatpush1.bf16.msra.mxu0 %v615
          %639 = vmatprep.subr.bf16.mxu0 0
          %640 = vmatpush1.bf16.msra.mxu0 %v616
          %641 = vmatprep.subr.bf16.mxu0 0
          %642 = vmatpush1.bf16.msra.mxu0 0
          %643 = vmatprep.subr.bf16.mxu0 0
          %644 = vmatpush1.bf16.msra.mxu0 0
          %645 = vmatprep.subr.bf16.mxu0 0
          %646 = vmatpush1.bf16.msra.mxu0 0
          %647 = vmatprep.subr.bf16.mxu0 0
          %648 = vmatpush1.bf16.msra.mxu0 0
          %649 = vmatprep.subr.bf16.mxu0 0
          %650 = vmatpush1.bf16.msra.mxu0 0
          %651 = vmatprep.subr.bf16.mxu0 0
          %652 = vmatpush1.bf16.msra.mxu0 0
          %653 = vmatprep.subr.bf16.mxu0 0
          %654 = vmatpush1.bf16.msra.mxu0 0
          %655 = vmatprep.subr.bf16.mxu0 0
          %656 = vmatpush1.bf16.msra.mxu0 0
          %657 = vmatprep.mubr.bf16.mxu0 0
          %658 = vmatmul.mubr.bf16.gmra.mrb[0].mxu0 %v553
          %v659 = vpop.f32.mrb[0].mxu0
          %v660 = vadd.f32 %v575, %v659
          %v661 = vpop.f32.mrb[0].mxu0
          %v662 = vpop.f32.mrb[0].mxu0
          %v663 = vpop.f32.mrb[0].mxu0
          %664 = vdwg.mxu0
          %665 = vadd.xlane.f32.xlu0 %v660
          %v666 = vpop.xlane.xlu0 %665
          %v667 = vmul.f32 %v666, 0.1
          %v668 = vsub.f32 %v660, %v667
          %v669 = vlaneseq
          %v670 = vand.u32 %v669, 127
          %vm671 = vcmp.lt.s32.totalorder %v670, 10
          %v672 = vsel %vm671, %v668, 0.0
          %v673 = vmul.f32 %v672, %v672
          %674 = vadd.xlane.f32.xlu0 %v673
          %v675 = vpop.xlane.xlu0 %674
          %v676 = vmul.f32 %v675, 0.1
          %v677 = vadd.f32 %v676, 1e-05
          %v678 = vrsqrt.pop %v677
          %v679 = vmul.f32 %v672, %v678
          %v680 = vld [vmem:[%s7] sm:$0x1]
          %v682 = vlaneseq
          %v683 = vshrl.u32 %v682, 7
          %v684 = vsub.s32 0, %v683
          %v685 = vrot.slane %v680, %v684
          %v687 = vmul.f32 %v679, %v685
          %v688 = vld [vmem:[%s8] sm:$0x1]
          %v690 = vlaneseq
          %v691 = vshrl.u32 %v690, 7
          %v692 = vsub.s32 0, %v691
          %v693 = vrot.slane %v688, %v692
          %v695 = vadd.f32 %v687, %v693
          %v696 = vmax.f32 %v695, 0.0
          %697 = vst [vmem:[%s392] sm:$0xff] %v696
        $region76: #{tpu_custom_call.1} parent=55 // pred_fallthru
          _
        %s698 = sand.u32 %s243, 1
        %s699 = scalar_lea.sflag [#allocation5], %s698
        %s700 = sand.u32 %s243, 1
        %s701 = smul.addr %s700, 8
        %s702 = scalar_lea.vmem [#allocation9], %s701
        // Predicated region
        $region77: #{tpu_custom_call.1} parent=55 // pred_check
          %p703 = pneg %p253
        $region78: #{tpu_custom_call.1} parent=55 // pred_check_branch
          %705 = sbr.rel (%p703) target = $region80
        $region79: #{tpu_custom_call.1} parent=55 // pred_region
          %s707 = ssub.s32 128, 128
          %708 = vsyncadd %s699, %s707
          %s709 = smul.addr %s31, 128
          %s710 = scalar_lea.hbm %s9, %s709
          %s712 = sshll.u32 %s702, 4
          %s713 = int_to_ptr.vmem [resolvable:$true] %s712
          %715 = dma.vmem_to_hbm [thread:$0]  %s713, 128, %s710, %s699
        $region80: #{tpu_custom_call.1} parent=55 // pred_fallthru
          _
      $region56: #{tpu_custom_call.1} parent=5 // pred_fallthru
        _
      %p716 = scmp.le.s32.totalorder 2, %s22
      // Predicated region
      $region81: #{tpu_custom_call.1} parent=5 // pred_check
        %p717 = pneg %p716
      $region82: #{tpu_custom_call.1} parent=5 // pred_check_branch
        %719 = sbr.rel (%p717) target = $region84
      $region83: #{tpu_custom_call.1} parent=5 // pred_region
        %s720 = ssub.s32 %s22, 2
        // Predicated region
        $region85: #{tpu_custom_call.1} parent=83 // pred_check
          %p721 = pneg %p259
        $region86: #{tpu_custom_call.1} parent=83 // pred_check_branch
          %723 = sbr.rel (%p721) target = $region88
        $region87: #{tpu_custom_call.1} parent=83 // pred_region
          %s724 = sand.u32 %s244, 1
          %s725 = scalar_lea.sflag [#allocation5], %s724
          %s726 = sand.u32 %s244, 1
          %s727 = smul.addr %s726, 8
          %s728 = scalar_lea.vmem [#allocation9], %s727
          %729 = dma.done %s725, 128
        $region88: #{tpu_custom_call.1} parent=83 // pred_fallthru
          _
      $region84: #{tpu_custom_call.1} parent=5 // pred_fallthru
        _
    $region6: #{tpu_custom_call.1} parent=1 // loop_footer
      %s26 = sadd.s32 1, %s22
    $region7: #{tpu_custom_call.1} parent=1 // loop_footer_branch
      %21 = sbr.rel target = $region3
    $region8: #{tpu_custom_call.1} parent=1 // loop_exit
      _
    %730 = vsyncpa [#allocation4], 1
    %s731 = scalar_lea.sflag [#allocation4], 1
    %732 = vsyncpa %s731, 1
    %733 = vsyncpa [#allocation7], 1
    %734 = vsyncpa [#allocation5], 1
    %s735 = scalar_lea.sflag [#allocation5], 1
    %736 = vsyncpa %s735, 1

</llo_original>
